<compile_context>
chip_gen: v5e
topology: v5e:2x2
jax: 0.10.0
libtpu: 0.0.40
codegen_flags: <defaults>
</compile_context>

<pallas_src>
import functools

import jax
import jax.numpy as jnp
from jax.experimental import pallas as pl
from jax.experimental.pallas import tpu as pltpu


def _round_up(v, m):
    return (v + m - 1) // m * m


def _lane_pad(d):
    # v6e/v7x MXUs are 2x 256-wide: use 256-multiples once the real dim can use
    # them; tiny dims just get the minimal 128-lane pad (pure padding anyway).
    return _round_up(d, 256) if d >= 128 else 128


def mlp_embedder_kernel(x_ref, w1_ref, b1_ref, w2_ref, b2_ref, o_ref):
    # fc1: bf16 MXU matmul, f32 accumulation; bias add + ReLU on the VPU.
    h = jnp.dot(x_ref[...], w1_ref[...], preferred_element_type=jnp.float32)
    h = jnp.maximum(h + b1_ref[...], 0.0)
    # fc2: feed the MXU bf16 again, accumulate f32, bias + ReLU, store f32.
    y = jnp.dot(h.astype(w2_ref.dtype), w2_ref[...],
                preferred_element_type=jnp.float32)
    o_ref[...] = jnp.maximum(y + b2_ref[...], 0.0)


def prepare_mlp_embedder_params(w1, b1, w2, b2, *, param_dtype=jnp.bfloat16):
    """One-time (parameter-load-time) lane-padding + bf16 casting of weights.

    w1: (F, H), b1: (H,), w2: (H, O), b2: (O,)  [fc1.weight.T / fc2.weight.T]
    Returns (w1p, b1p, w2p, b2p) with H/O zero-padded to lane-dense widths.
    Zero padding is exact: padded hidden cols give relu(0+0)=0 and meet zero
    rows of W2; padded output cols are sliced off by the wrapper.
    """
    f, h = w1.shape
    h2, o = w2.shape
    assert h2 == h
    hp = _lane_pad(h)
    op = _lane_pad(o)

    w1p = jnp.zeros((f, hp), param_dtype).at[:, :h].set(w1.astype(param_dtype))
    b1p = jnp.zeros((1, hp), jnp.float32).at[0, :h].set(b1.astype(jnp.float32))
    w2p = jnp.zeros((hp, op), param_dtype).at[:h, :o].set(w2.astype(param_dtype))
    b2p = jnp.zeros((1, op), jnp.float32).at[0, :o].set(b2.astype(jnp.float32))
    return w1p, b1p, w2p, b2p


def mlp_embedder_forward(x, w1p, b1p, w2p, b2p, *, out_features, tm=256):
    """x: (N, F) -> relu(relu(x @ W1 + b1) @ W2 + b2), shape (N, out_features)."""
    n, f = x.shape
    hp = w1p.shape[1]
    op = w2p.shape[1]

    # --- row-tile selection ---
    # Cap tm so the fused f32 hidden tile (tm, hp) stays <= ~128 KiB of vregs.
    tm_cap = max(16, ((128 * 1024) // (hp * 4)) // 16 * 16)
    tm = max(16, min(tm, tm_cap))
    # Keep the grid >= 2 steps so v7x can split row blocks across its 2 TCs.
    half_rows = _round_up(-(-n // 2), 16)
    tm = min(tm, max(16, half_rows))
    npad = _round_up(n, tm)
    grid = (npad // tm,)

    xb = x.astype(jnp.bfloat16)
    if npad != n:
        xb = jnp.pad(xb, ((0, npad - n), (0, 0)))  # row pad only; sliced off below

    # VMEM budget: pipeline double-buffers every operand/output block.
    est = 2 * (tm * f * 2                       # x tile (bf16)
               + tm * op * 4                    # output tile (f32)
               + w1p.size * w1p.dtype.itemsize  # resident W1
               + w2p.size * w2p.dtype.itemsize  # resident W2
               + hp * 4 + op * 4)               # biases (f32)
    vmem_limit = int(min(64 * 1024 * 1024, max(16 * 1024 * 1024, 2 * est)))

    out = pl.pallas_call(
        mlp_embedder_kernel,
        out_shape=jax.ShapeDtypeStruct((npad, op), jnp.float32),
        grid_spec=pltpu.PrefetchScalarGridSpec(
            num_scalar_prefetch=0,
            grid=grid,
            in_specs=[
                pl.BlockSpec((tm, f), lambda i: (i, 0)),    # x row tile, real width
                pl.BlockSpec((f, hp), lambda i: (0, 0)),    # W1 resident
                pl.BlockSpec((1, hp), lambda i: (0, 0)),    # b1 resident
                pl.BlockSpec((hp, op), lambda i: (0, 0)),   # W2 resident
                pl.BlockSpec((1, op), lambda i: (0, 0)),    # b2 resident
            ],
            out_specs=pl.BlockSpec((tm, op), lambda i: (i, 0)),
        ),
        compiler_params=pltpu.CompilerParams(
            dimension_semantics=("parallel",),
            vmem_limit_bytes=vmem_limit),
    )(xb, w1p, b1p, w2p, b2p)

    return out[:n, :out_features]


def mlp_embedder_reference(x, w1, b1, w2, b2):
    """Pure-JAX f32 reference mirroring the PyTorch MLPEmbedder forward."""
    h = jnp.maximum(x @ w1 + b1, 0.0)
    return jnp.maximum(h @ w2 + b2, 0.0)


if __name__ == "__main__":
    # Small shapes consistent with the module: N rows, F input features,
    # hidden_neurons=H, output_dim=O.
    N, F, H, O = 64, 4, 32, 4

    key = jax.random.PRNGKey(0)
    kx, k1, k2, k3, k4 = jax.random.split(key, 5)
    x = jax.random.normal(kx, (N, F), jnp.float32)
    w1 = 0.1 * jax.random.normal(k1, (F, H), jnp.float32)
    b1 = 0.1 * jax.random.normal(k2, (H,), jnp.float32)
    w2 = 0.1 * jax.random.normal(k3, (H, O), jnp.float32)
    b2 = 0.1 * jax.random.normal(k4, (O,), jnp.float32)

    # Parameter prep happens once (simulates load-time), not per forward call.
    params = prepare_mlp_embedder_params(w1, b1, w2, b2)

    fwd = jax.jit(functools.partial(mlp_embedder_forward, out_features=O))
    out = jax.block_until_ready(fwd(x, *params))
    ref = mlp_embedder_reference(x, w1, b1, w2, b2)

    assert out.shape == (N, O), out.shape
    # bf16 MXU inputs with f32 accumulation -> ~1e-2-level tolerance vs f32 ref.
    assert jnp.allclose(out, ref, atol=2e-2, rtol=2e-2), (out, ref)

    print("KERNEL_OK")
</pallas_src>

<mosaic_0001>
module attributes {stable_mosaic.version = 11 : i64} {
  func.func @mlp_embedder_kernel(%arg0: i32, %arg1: memref<32x4xbf16, #tpu.memory_space<vmem>>, %arg2: memref<4x128xbf16, #tpu.memory_space<vmem>>, %arg3: memref<1x128xf32, #tpu.memory_space<vmem>>, %arg4: memref<128x128xbf16, #tpu.memory_space<vmem>>, %arg5: memref<1x128xf32, #tpu.memory_space<vmem>>, %arg6: memref<32x128xf32, #tpu.memory_space<vmem>>) attributes {dimension_semantics = [#tpu.dimension_semantics<parallel>], iteration_bounds = array<i64: 2>, scalar_prefetch = 0 : i64, scratch_operands = 0 : i64, tpu.core_type = #tpu.core_type<tc>, window_params = [{transform_indices = @transform_0, window_bounds = array<i64: 32, 4>}, {pipeline_mode = #tpu.pipeline_mode<synchronous>, transform_indices = @transform_1, window_bounds = array<i64: 4, 128>}, {pipeline_mode = #tpu.pipeline_mode<synchronous>, transform_indices = @transform_2, window_bounds = array<i64: 1, 128>}, {pipeline_mode = #tpu.pipeline_mode<synchronous>, transform_indices = @transform_3, window_bounds = array<i64: 128, 128>}, {pipeline_mode = #tpu.pipeline_mode<synchronous>, transform_indices = @transform_4, window_bounds = array<i64: 1, 128>}, {transform_indices = @transform_5, window_bounds = array<i64: 32, 128>}]} {
    %c0 = arith.constant 0 : index
    %c0_0 = arith.constant 0 : index
    %0 = vector.load %arg1[%c0, %c0_0] : memref<32x4xbf16, #tpu.memory_space<vmem>>, vector<32x4xbf16>
    %c0_1 = arith.constant 0 : index
    %c0_2 = arith.constant 0 : index
    %1 = vector.load %arg2[%c0_1, %c0_2] : memref<4x128xbf16, #tpu.memory_space<vmem>>, vector<4x128xbf16>
    %cst = arith.constant dense<0.000000e+00> : vector<32x128xf32>
    %2 = tpu.matmul %0, %1, %cst {dimension_numbers = #tpu.dot_dimension_numbers<[1], [0], [0], [1], [0, 0, 1, 1], [], []>} : vector<32x4xbf16>, vector<4x128xbf16>, vector<32x128xf32> -> vector<32x128xf32>
    %c0_3 = arith.constant 0 : index
    %c0_4 = arith.constant 0 : index
    %3 = vector.load %arg3[%c0_3, %c0_4] : memref<1x128xf32, #tpu.memory_space<vmem>>, vector<1x128xf32>
    %4 = vector.broadcast %3 : vector<1x128xf32> to vector<32x128xf32>
    %5 = arith.addf %2, %4 : vector<32x128xf32>
    %cst_5 = arith.constant 0.000000e+00 : f32
    %6 = vector.broadcast %cst_5 : f32 to vector<32x128xf32>
    %7 = arith.maximumf %5, %6 : vector<32x128xf32>
    %8 = arith.truncf %7 : vector<32x128xf32> to vector<32x128xbf16>
    %c0_6 = arith.constant 0 : index
    %c0_7 = arith.constant 0 : index
    %9 = vector.load %arg4[%c0_6, %c0_7] : memref<128x128xbf16, #tpu.memory_space<vmem>>, vector<128x128xbf16>
    %cst_8 = arith.constant dense<0.000000e+00> : vector<32x128xf32>
    %10 = tpu.matmul %8, %9, %cst_8 {dimension_numbers = #tpu.dot_dimension_numbers<[1], [0], [0], [1], [0, 0, 1, 1], [], []>} : vector<32x128xbf16>, vector<128x128xbf16>, vector<32x128xf32> -> vector<32x128xf32>
    %c0_9 = arith.constant 0 : index
    %c0_10 = arith.constant 0 : index
    %11 = vector.load %arg5[%c0_9, %c0_10] : memref<1x128xf32, #tpu.memory_space<vmem>>, vector<1x128xf32>
    %12 = vector.broadcast %11 : vector<1x128xf32> to vector<32x128xf32>
    %13 = arith.addf %10, %12 : vector<32x128xf32>
    %cst_11 = arith.constant 0.000000e+00 : f32
    %14 = vector.broadcast %cst_11 : f32 to vector<32x128xf32>
    %15 = arith.maximumf %13, %14 : vector<32x128xf32>
    %c0_12 = arith.constant 0 : index
    %c0_13 = arith.constant 0 : index
    %16 = vector.load %arg6[%c0_12, %c0_13] : memref<32x128xf32, #tpu.memory_space<vmem>>, vector<32x128xf32>
    tpu.vector_store %arg6[%c0_12, %c0_13], %15 {strides = array<i32>} : memref<32x128xf32, #tpu.memory_space<vmem>>, vector<32x128xf32>,
    return
  }
  func.func @transform_0(%arg0: i32) -> (i32, i32) {
    %c0_i32 = arith.constant 0 : i32
    %c0_i32_0 = arith.constant 0 : i32
    return %arg0, %c0_i32 : i32, i32
  }
  func.func @transform_1(%arg0: i32) -> (i32, i32) {
    %c0_i32 = arith.constant 0 : i32
    %c0_i32_0 = arith.constant 0 : i32
    %c0_i32_1 = arith.constant 0 : i32
    return %c0_i32, %c0_i32_0 : i32, i32
  }
  func.func @transform_2(%arg0: i32) -> (i32, i32) {
    %c0_i32 = arith.constant 0 : i32
    %c0_i32_0 = arith.constant 0 : i32
    %c0_i32_1 = arith.constant 0 : i32
    return %c0_i32, %c0_i32_0 : i32, i32
  }
  func.func @transform_3(%arg0: i32) -> (i32, i32) {
    %c0_i32 = arith.constant 0 : i32
    %c0_i32_0 = arith.constant 0 : i32
    %c0_i32_1 = arith.constant 0 : i32
    return %c0_i32, %c0_i32_0 : i32, i32
  }
  func.func @transform_4(%arg0: i32) -> (i32, i32) {
    %c0_i32 = arith.constant 0 : i32
    %c0_i32_0 = arith.constant 0 : i32
    %c0_i32_1 = arith.constant 0 : i32
    return %c0_i32, %c0_i32_0 : i32, i32
  }
  func.func @transform_5(%arg0: i32) -> (i32, i32) {
    %c0_i32 = arith.constant 0 : i32
    %c0_i32_0 = arith.constant 0 : i32
    return %arg0, %c0_i32 : i32, i32
  }
}

</mosaic_0001>

<llo_original>
// kernel: mlp_embedder_forward.1
$region0: #{mlp_embedder_forward.1}
  #allocation0 [shape = 'u32[]', space=smem, size = 0x4, offset = 0x4, fixed_abs, tag = 'smem constant byte address 0x4 - core index']
  #allocation1 [shape = 'u32[72,128]{1,0:T(1,128)}', space=vmem, size = 0x9000, scoped, tag = 'internal scratch']
  %s0 = inlined_call_operand.vmem [shape: bf16[64,4], index: 0, kind: input, shape index: {}]
  %s1 = inlined_call_operand.vmem [shape: bf16[4,128], index: 1, kind: input, shape index: {}]
  %s2 = inlined_call_operand.vmem [shape: f32[1,128], index: 2, kind: input, shape index: {}]
  %s3 = inlined_call_operand.hbm [shape: bf16[128,128], index: 3, kind: input, shape index: {}]
  %s4 = inlined_call_operand.vmem [shape: f32[1,128], index: 4, kind: input, shape index: {}]
  %s5 = inlined_call_operand.vmem [shape: f32[64,128], index: 5, kind: output, shape index: {}]
  %s6 = sld [smem:[#allocation0]]
  $region57: #{mlp_embedder_forward.1} parent=0
    _
  %s8 = ssub.s32 1, %s6
  %s9 = scalar_select 0, %s8, %s6
  $region1: #{mlp_embedder_forward.1} parent=0
    #allocation2 [shape = 'u8[32768]{0}', space=vmem, size = 0x8000, scoped, tag = 'input window, operand 3, single buffered']
    #allocation3 [shape = 's32[2]{0}', space=sflag, size = 0x8, scoped, tag = 'scoped memory for mlp_embedder_forward.1']
    %10 = vsyncpa [#allocation3], 0
    loop: start=0, step=1, limit=4
    $region2: #{mlp_embedder_forward.1} parent=1 // loop_pre_header
      _
    $region3: #{mlp_embedder_forward.1} parent=1 // loop_header
      %s12 = sphi 0, %s16
      %p13 = scmp.ge.s32.totalorder %s12, 4
      %s22 = sphi 0, %s24
      %s25 = sphi 0, %s22
      %s26 = sphi 0, %s25
      %s42 = sphi 0, %s26
      %s46 = sphi 0, %s46
      %s48 = sphi 0, %s46
      %s49 = sphi 0, %s48
      %s63 = sphi 0, %s49
      %s67 = sphi 0, %s67
      %s69 = sphi 0, %s67
      %s70 = sphi 0, %s69
      %s84 = sphi 0, %s70
      %s88 = sphi 0, %s88
      %s90 = sphi 0, %s88
      %s91 = sphi 0, %s90
      %s105 = sphi 0, %s91
      %s109 = sphi 0, %s109
      %s111 = sphi 0, %s109
      %s112 = sphi 0, %s111
      %s126 = sphi 0, %s112
      %s132 = sphi 0, %s134
      %s135 = sphi 0, %s132
      %s136 = sphi 0, %s135
      %s152 = sphi 0, %s136
    $region4: #{mlp_embedder_forward.1} parent=1 // loop_header_branch
      %15 = sbr.rel (%p13) target = $region8
    $region5: #{mlp_embedder_forward.1} parent=1 // loop_body
      %s17 = ssub.s32 %s12, 1
      %s18 = ssub.s32 %s12, 2
      %s19 = sadd.s32 %s12, 1
      %s20 = ssub.s32 %s12, %s19
      %p21 = scmp.eq.s32.totalorder %s20, 0
      %s23 = sadd.s32 %s22, 1
      %s24 = scalar_select %p21, %s22, %s23
      %p27 = pneg %p21
      %p28 = scmp.eq.s32.totalorder %s12, 1
      %p29 = por %p27, %p28
      %p30 = scmp.ne.s32.totalorder %s22, %s25
      %p31 = scmp.eq.s32.totalorder %s12, 0
      %p32 = por %p30, %p31
      %p33 = scmp.ne.s32.totalorder %s22, %s25
      %p34 = scmp.eq.s32.totalorder %s17, 1
      %p35 = por %p33, %p34
      %p36 = scmp.ne.s32.totalorder %s25, %s26
      %p37 = scmp.eq.s32.totalorder %s17, 0
      %p38 = por %p36, %p37
      %p39 = scmp.ne.s32.totalorder %s25, %s26
      %p40 = scmp.eq.s32.totalorder %s18, 1
      %p41 = por %p39, %p40
      %p43 = scmp.ne.s32.totalorder %s26, %s42
      %p44 = scmp.eq.s32.totalorder %s18, 0
      %p45 = por %p43, %p44
      %s47 = sadd.s32 %s46, 1
      %p50 = scmp.eq.s32.totalorder %s12, 1
      %p51 = scmp.ne.s32.totalorder %s46, %s48
      %p52 = scmp.eq.s32.totalorder %s12, 0
      %p53 = por %p51, %p52
      %p54 = scmp.ne.s32.totalorder %s46, %s48
      %p55 = scmp.eq.s32.totalorder %s17, 1
      %p56 = por %p54, %p55
      %p57 = scmp.ne.s32.totalorder %s48, %s49
      %p58 = scmp.eq.s32.totalorder %s17, 0
      %p59 = por %p57, %p58
      %p60 = scmp.ne.s32.totalorder %s48, %s49
      %p61 = scmp.eq.s32.totalorder %s18, 1
      %p62 = por %p60, %p61
      %p64 = scmp.ne.s32.totalorder %s49, %s63
      %p65 = scmp.eq.s32.totalorder %s18, 0
      %p66 = por %p64, %p65
      %s68 = sadd.s32 %s67, 1
      %p71 = scmp.eq.s32.totalorder %s12, 1
      %p72 = scmp.ne.s32.totalorder %s67, %s69
      %p73 = scmp.eq.s32.totalorder %s12, 0
      %p74 = por %p72, %p73
      %p75 = scmp.ne.s32.totalorder %s67, %s69
      %p76 = scmp.eq.s32.totalorder %s17, 1
      %p77 = por %p75, %p76
      %p78 = scmp.ne.s32.totalorder %s69, %s70
      %p79 = scmp.eq.s32.totalorder %s17, 0
      %p80 = por %p78, %p79
      %p81 = scmp.ne.s32.totalorder %s69, %s70
      %p82 = scmp.eq.s32.totalorder %s18, 1
      %p83 = por %p81, %p82
      %p85 = scmp.ne.s32.totalorder %s70, %s84
      %p86 = scmp.eq.s32.totalorder %s18, 0
      %p87 = por %p85, %p86
      %s89 = sadd.s32 %s88, 1
      %p92 = scmp.eq.s32.totalorder %s12, 1
      %p93 = scmp.ne.s32.totalorder %s88, %s90
      %p94 = scmp.eq.s32.totalorder %s12, 0
      %p95 = por %p93, %p94
      %p96 = scmp.ne.s32.totalorder %s88, %s90
      %p97 = scmp.eq.s32.totalorder %s17, 1
      %p98 = por %p96, %p97
      %p99 = scmp.ne.s32.totalorder %s90, %s91
      %p100 = scmp.eq.s32.totalorder %s17, 0
      %p101 = por %p99, %p100
      %p102 = scmp.ne.s32.totalorder %s90, %s91
      %p103 = scmp.eq.s32.totalorder %s18, 1
      %p104 = por %p102, %p103
      %p106 = scmp.ne.s32.totalorder %s91, %s105
      %p107 = scmp.eq.s32.totalorder %s18, 0
      %p108 = por %p106, %p107
      %s110 = sadd.s32 %s109, 1
      %p113 = scmp.eq.s32.totalorder %s12, 1
      %p114 = scmp.ne.s32.totalorder %s109, %s111
      %p115 = scmp.eq.s32.totalorder %s12, 0
      %p116 = por %p114, %p115
      %p117 = scmp.ne.s32.totalorder %s109, %s111
      %p118 = scmp.eq.s32.totalorder %s17, 1
      %p119 = por %p117, %p118
      %p120 = scmp.ne.s32.totalorder %s111, %s112
      %p121 = scmp.eq.s32.totalorder %s17, 0
      %p122 = por %p120, %p121
      %p123 = scmp.ne.s32.totalorder %s111, %s112
      %p124 = scmp.eq.s32.totalorder %s18, 1
      %p125 = por %p123, %p124
      %p127 = scmp.ne.s32.totalorder %s112, %s126
      %p128 = scmp.eq.s32.totalorder %s18, 0
      %p129 = por %p127, %p128
      %s130 = ssub.s32 %s12, %s19
      %p131 = scmp.eq.s32.totalorder %s130, 0
      %s133 = sadd.s32 %s132, 1
      %s134 = scalar_select %p131, %s132, %s133
      %p137 = pneg %p131
      %p138 = scmp.eq.s32.totalorder %s12, 1
      %p139 = por %p137, %p138
      %p140 = scmp.ne.s32.totalorder %s132, %s135
      %p141 = scmp.eq.s32.totalorder %s12, 0
      %p142 = por %p140, %p141
      %p143 = scmp.ne.s32.totalorder %s132, %s135
      %p144 = scmp.eq.s32.totalorder %s17, 1
      %p145 = por %p143, %p144
      %p146 = scmp.ne.s32.totalorder %s135, %s136
      %p147 = scmp.eq.s32.totalorder %s17, 0
      %p148 = por %p146, %p147
      %p149 = scmp.ne.s32.totalorder %s135, %s136
      %p150 = scmp.eq.s32.totalorder %s18, 1
      %p151 = por %p149, %p150
      %p153 = scmp.ne.s32.totalorder %s136, %s152
      %p154 = scmp.eq.s32.totalorder %s18, 0
      %p155 = por %p153, %p154
      %p156 = scmp.le.s32.totalorder 1, %s12
      %p157 = scmp.lt.s32.totalorder %s12, 3
      %p158 = pnand %p156, %p157
      %p159 = pneg %p158
      // Predicated region
      $region9: #{mlp_embedder_forward.1} parent=5 // pred_check
        _
      $region10: #{mlp_embedder_forward.1} parent=5 // pred_check_branch
        %161 = sbr.rel (%p158) target = $region12
      $region11: #{mlp_embedder_forward.1} parent=5 // pred_region
        %s162 = ssub.s32 %s12, 1
        // Predicated region
        $region13: #{mlp_embedder_forward.1} parent=11 // pred_check
          %p163 = pneg %p59
        $region14: #{mlp_embedder_forward.1} parent=11 // pred_check_branch
          %165 = sbr.rel (%p163) target = $region16
        $region15: #{mlp_embedder_forward.1} parent=11 // pred_region
          _
        $region16: #{mlp_embedder_forward.1} parent=11 // pred_fallthru
          _
        // Predicated region
        $region17: #{mlp_embedder_forward.1} parent=11 // pred_check
          %p166 = pneg %p80
        $region18: #{mlp_embedder_forward.1} parent=11 // pred_check_branch
          %168 = sbr.rel (%p166) target = $region20
        $region19: #{mlp_embedder_forward.1} parent=11 // pred_region
          _
        $region20: #{mlp_embedder_forward.1} parent=11 // pred_fallthru
          _
        // Predicated region
        $region21: #{mlp_embedder_forward.1} parent=11 // pred_check
          %p169 = pneg %p101
        $region22: #{mlp_embedder_forward.1} parent=11 // pred_check_branch
          %171 = sbr.rel (%p169) target = $region24
        $region23: #{mlp_embedder_forward.1} parent=11 // pred_region
          %173 = vsyncadd [#allocation3], 0
          %s174 = sshll.u32 %s3, 4
          %s175 = int_to_ptr.hbm [resolvable:$true] %s174
          %s176 = sshll.u32 [#allocation2], 4
          %s177 = int_to_ptr.vmem [resolvable:$true] %s176
          %182 = dma.hbm_to_vmem [thread:$0]  %s175, 1024, %s177, [#allocation3], 64, 64, 4
        $region24: #{mlp_embedder_forward.1} parent=11 // pred_fallthru
          _
        // Predicated region
        $region25: #{mlp_embedder_forward.1} parent=11 // pred_check
          %p183 = pneg %p122
        $region26: #{mlp_embedder_forward.1} parent=11 // pred_check_branch
          %185 = sbr.rel (%p183) target = $region28
        $region27: #{mlp_embedder_forward.1} parent=11 // pred_region
          _
        $region28: #{mlp_embedder_forward.1} parent=11 // pred_fallthru
          _
      $region12: #{mlp_embedder_forward.1} parent=5 // pred_fallthru
        _
      %p186 = scmp.lt.s32.totalorder %s12, 2
      // Predicated region
      $region29: #{mlp_embedder_forward.1} parent=5 // pred_check
        %p187 = pneg %p186
      $region30: #{mlp_embedder_forward.1} parent=5 // pred_check_branch
        %189 = sbr.rel (%p187) target = $region32
      $region31: #{mlp_embedder_forward.1} parent=5 // pred_region
        // Predicated region
        $region33: #{mlp_embedder_forward.1} parent=31 // pred_check
          %p190 = pneg %p32
        $region34: #{mlp_embedder_forward.1} parent=31 // pred_check_branch
          %192 = sbr.rel (%p190) target = $region36
        $region35: #{mlp_embedder_forward.1} parent=31 // pred_region
          %s193 = smul.u32 4, %s12
          %p194 = scmp.lt.s32.totalorder %s193, 7
          %s195 = scalar_select %p194, %s193, 7
          %s196 = smul.addr %s195, 4
          %s197 = scalar_lea.vmem %s0, %s196
          %s198 = smul.u32 4, %s12
        $region36: #{mlp_embedder_forward.1} parent=31 // pred_fallthru
          _
      $region32: #{mlp_embedder_forward.1} parent=5 // pred_fallthru
        _
      %p199 = scmp.le.s32.totalorder 1, %s12
      %p200 = scmp.lt.s32.totalorder %s12, 3
      %p201 = pnand %p199, %p200
      %p202 = pneg %p201
      // Predicated region
      $region37: #{mlp_embedder_forward.1} parent=5 // pred_check
        _
      $region38: #{mlp_embedder_forward.1} parent=5 // pred_check_branch
        %204 = sbr.rel (%p201) target = $region40
      $region39: #{mlp_embedder_forward.1} parent=5 // pred_region
        %s205 = ssub.s32 %s12, 1
        // Predicated region
        $region41: #{mlp_embedder_forward.1} parent=39 // pred_check
          %p206 = pneg %p101
        $region42: #{mlp_embedder_forward.1} parent=39 // pred_check_branch
          %208 = sbr.rel (%p206) target = $region44
        $region43: #{mlp_embedder_forward.1} parent=39 // pred_region
          %210 = dma.done [#allocation3], 1024
        $region44: #{mlp_embedder_forward.1} parent=39 // pred_fallthru
          _
        %s211 = smul.u32 4, %s17
        %p212 = scmp.lt.s32.totalorder %s211, 7
        %s213 = scalar_select %p212, %s211, 7
        %s214 = smul.addr %s213, 4
        %s215 = scalar_lea.vmem %s0, %s214
        %p216 = pneg %p38
        %p217 = pneg %p35
        %p218 = pneg %p59
        %p219 = pneg %p56
        %p220 = pneg %p80
        %p221 = pneg %p77
        %p222 = pneg %p101
        %p223 = pneg %p98
        %p224 = pneg %p122
        %p225 = pneg %p119
        %p226 = pneg %p148
        %p227 = pneg %p145
        %s228 = smul.u32 4, %s17
        %p229 = scmp.lt.s32.totalorder %s228, 7
        %s230 = scalar_select %p229, %s228, 7
        %s231 = smul.addr %s230, 8
        %s232 = scalar_lea.vmem %s5, %s231
        %s233 = smul.u32 4, %s17
        %p234 = scmp.lt.s32.totalorder %s233, 7
        %s235 = scalar_select %p234, %s233, 7
        %s236 = smul.addr %s235, 4
        %s237 = scalar_lea.vmem %s0, %s236
        %s238 = smul.u32 4, %s17
        %s239 = smul.u32 4, %s17
        %p240 = scmp.lt.s32.totalorder %s239, 7
        %s241 = scalar_select %p240, %s239, 7
        %s242 = smul.addr %s241, 8
        %s243 = scalar_lea.vmem %s5, %s242
        %s244 = smul.u32 4, %s17
        %v246 = vld [vmem:[%s237] sm:$0xf]
        %v247 = vld [vmem:[%s237 + $0x4] sm:$0xf]
        %v248 = vld [vmem:[%s237 + $0x8] sm:$0xf]
        %v249 = vld [vmem:[%s237 + $0xc] sm:$0xf]
        %v250 = vld [vmem:[%s1] sm:$0x3]
        %v251 = vld [vmem:[%s2] sm:$0x1]
        %v253 = vperm.slane %v251, 0
        %v259 = vunpack.c.l.b16 %v246
        %v260 = vunpack.c.l.b16 %v247
        %v261 = vunpack.c.l.b16 %v248
        %v262 = vunpack.c.l.b16 %v249
        %v263 = vpack.c.b16 %v260, %v259
        %v264 = vpack.c.b16 %v262, %v261
        %vm265 = vcmask 31744
        %v267 = vsel %vm265, %v263, 0
        %v270 = vsel %vm265, %v264, 0
        %vm272 = vcmask 1041408
        %v274 = vsel %vm272, %v250, 0
        %276 = vmatpush.bf16.msra.mxu0 0
        %277 = vmatpush.bf16.msra.mxu0 0
        %278 = vmatpush.bf16.msra.mxu0 0
        %279 = vmatpush.bf16.msra.mxu0 0
        %280 = vmatpush.bf16.msra.mxu0 0
        %281 = vmatpush.bf16.msra.mxu0 0
        %282 = vmatpush.bf16.msra.mxu0 0
        %283 = vmatpush.bf16.msra.mxu0 %v274
        %284 = vmatmul.bf16.gmra.mxu0 %v267
        %v285 = vpop.f32.mrf.mxu0
        %v286 = vadd.f32 %v253, %v285
        %v287 = vpop.f32.mrf.mxu0
        %v288 = vadd.f32 %v253, %v287
        %289 = vmatmul.bf16.gmra.mxu0 %v270
        %v290 = vpop.f32.mrf.mxu0
        %v291 = vadd.f32 %v253, %v290
        %v292 = vpop.f32.mrf.mxu0
        %v293 = vadd.f32 %v253, %v292
        %294 = vdwg.mxu0
        %v295 = vmax.f32 %v286, 0.0
        %v296 = vmax.f32 %v288, 0.0
        %v297 = vmax.f32 %v291, 0.0
        %v298 = vmax.f32 %v293, 0.0
        %v299 = vpack.c.bf16 %v296, %v295
        %v300 = vpack.c.bf16 %v298, %v297
        %v301 = vld [vmem:[#allocation2] sm:$0xf]
        %v302 = vld [vmem:[#allocation2 + $0x4] sm:$0xf]
        %v303 = vld [vmem:[#allocation2 + $0x8] sm:$0xf]
        %v304 = vld [vmem:[#allocation2 + $0xc] sm:$0xf]
        %v305 = vld [vmem:[#allocation2 + $0x10] sm:$0xf]
        %v306 = vld [vmem:[#allocation2 + $0x14] sm:$0xf]
        %v307 = vld [vmem:[#allocation2 + $0x18] sm:$0xf]
        %v308 = vld [vmem:[#allocation2 + $0x1c] sm:$0xf]
        %v309 = vld [vmem:[#allocation2 + $0x20] sm:$0xf]
        %v310 = vld [vmem:[#allocation2 + $0x24] sm:$0xf]
        %v311 = vld [vmem:[#allocation2 + $0x28] sm:$0xf]
        %v312 = vld [vmem:[#allocation2 + $0x2c] sm:$0xf]
        %v313 = vld [vmem:[#allocation2 + $0x30] sm:$0xf]
        %v314 = vld [vmem:[#allocation2 + $0x34] sm:$0xf]
        %v315 = vld [vmem:[#allocation2 + $0x38] sm:$0xf]
        %v316 = vld [vmem:[#allocation2 + $0x3c] sm:$0xf]
        %v317 = vld [vmem:[%s4] sm:$0x1]
        %v319 = vperm.slane %v317, 0
        %v337 = vunpack.c.l.b16 %v301
        %v338 = vunpack.c.l.b16 %v302
        %v339 = vunpack.c.l.b16 %v303
        %v340 = vunpack.c.l.b16 %v304
        %v341 = vunpack.c.l.b16 %v305
        %v342 = vunpack.c.l.b16 %v306
        %v343 = vunpack.c.l.b16 %v307
        %v344 = vunpack.c.l.b16 %v308
        %v345 = vunpack.c.l.b16 %v309
        %v346 = vunpack.c.l.b16 %v310
        %v347 = vunpack.c.l.b16 %v311
        %v348 = vunpack.c.l.b16 %v312
        %v349 = vunpack.c.l.b16 %v313
        %v350 = vunpack.c.l.b16 %v314
        %v351 = vunpack.c.l.b16 %v315
        %v352 = vunpack.c.l.b16 %v316
        %v353 = vpack.c.b16 %v338, %v337
        %v354 = vpack.c.b16 %v340, %v339
        %v355 = vpack.c.b16 %v342, %v341
        %v356 = vpack.c.b16 %v344, %v343
        %v357 = vpack.c.b16 %v346, %v345
        %v358 = vpack.c.b16 %v348, %v347
        %v359 = vpack.c.b16 %v350, %v349
        %v360 = vpack.c.b16 %v352, %v351
        %369 = vmatpush.bf16.msra.mxu0 %v360
        %370 = vmatpush.bf16.msra.mxu0 %v359
        %371 = vmatpush.bf16.msra.mxu0 %v358
        %372 = vmatpush.bf16.msra.mxu0 %v357
        %373 = vmatpush.bf16.msra.mxu0 %v356
        %374 = vmatpush.bf16.msra.mxu0 %v355
        %375 = vmatpush.bf16.msra.mxu0 %v354
        %376 = vmatpush.bf16.msra.mxu0 %v353
        %377 = vmatmul.bf16.gmra.mxu0 %v299
        %v378 = vpop.f32.mrf.mxu0
        %v379 = vadd.f32 %v319, %v378
        %v380 = vpop.f32.mrf.mxu0
        %v381 = vadd.f32 %v319, %v380
        %382 = vmatmul.bf16.gmra.mxu0 %v300
        %v383 = vpop.f32.mrf.mxu0
        %v384 = vadd.f32 %v319, %v383
        %v385 = vpop.f32.mrf.mxu0
        %v386 = vadd.f32 %v319, %v385
        %387 = vdwg.mxu0
        %v388 = vmax.f32 %v379, 0.0
        %v389 = vmax.f32 %v381, 0.0
        %v390 = vmax.f32 %v384, 0.0
        %v391 = vmax.f32 %v386, 0.0
        %392 = vst [vmem:[%s243] sm:$0xff] %v388
        %393 = vst [vmem:[%s243 + $0x8] sm:$0xff] %v389
        %394 = vst [vmem:[%s243 + $0x10] sm:$0xff] %v390
        %395 = vst [vmem:[%s243 + $0x18] sm:$0xff] %v391
        %s396 = smul.u32 4, %s17
        %p397 = scmp.lt.s32.totalorder %s396, 7
        %s398 = scalar_select %p397, %s396, 7
        %s399 = smul.addr %s398, 8
        %s400 = scalar_lea.vmem %s5, %s399
        // Predicated region
        $region45: #{mlp_embedder_forward.1} parent=39 // pred_check
          %p401 = pneg %p145
        $region46: #{mlp_embedder_forward.1} parent=39 // pred_check_branch
          %403 = sbr.rel (%p401) target = $region48
        $region47: #{mlp_embedder_forward.1} parent=39 // pred_region
          %s404 = smul.u32 4, %s17
        $region48: #{mlp_embedder_forward.1} parent=39 // pred_fallthru
          _
      $region40: #{mlp_embedder_forward.1} parent=5 // pred_fallthru
        _
      %p405 = scmp.le.s32.totalorder 2, %s12
      // Predicated region
      $region49: #{mlp_embedder_forward.1} parent=5 // pred_check
        %p406 = pneg %p405
      $region50: #{mlp_embedder_forward.1} parent=5 // pred_check_branch
        %408 = sbr.rel (%p406) target = $region52
      $region51: #{mlp_embedder_forward.1} parent=5 // pred_region
        %s409 = ssub.s32 %s12, 2
        // Predicated region
        $region53: #{mlp_embedder_forward.1} parent=51 // pred_check
          %p410 = pneg %p151
        $region54: #{mlp_embedder_forward.1} parent=51 // pred_check_branch
          %412 = sbr.rel (%p410) target = $region56
        $region55: #{mlp_embedder_forward.1} parent=51 // pred_region
          %s413 = smul.u32 4, %s18
          %p414 = scmp.lt.s32.totalorder %s413, 7
          %s415 = scalar_select %p414, %s413, 7
          %s416 = smul.addr %s415, 8
          %s417 = scalar_lea.vmem %s5, %s416
        $region56: #{mlp_embedder_forward.1} parent=51 // pred_fallthru
          _
      $region52: #{mlp_embedder_forward.1} parent=5 // pred_fallthru
        _
    $region6: #{mlp_embedder_forward.1} parent=1 // loop_footer
      %s16 = sadd.s32 1, %s12
    $region7: #{mlp_embedder_forward.1} parent=1 // loop_footer_branch
      %11 = sbr.rel target = $region3
    $region8: #{mlp_embedder_forward.1} parent=1 // loop_exit
      _
    %418 = vsyncpa [#allocation3], 1
    %s419 = scalar_lea.sflag [#allocation3], 1
    %420 = vsyncpa %s419, 1

</llo_original>
